<compile_context>
chip_gen: v6e
topology: v6e:2x2x1
jax: 0.10.0
libtpu: 0.0.40
codegen_flags: <defaults>
</compile_context>

<pallas_src>
import jax
import jax.numpy as jnp
from jax.experimental import pallas as pl
from jax.experimental.pallas import tpu as pltpu

HW = 9          # 3 * 3 board positions
BN_EPS = 1e-5


def _rup(n, m):
    return ((n + m - 1) // m) * m


def conv_block_kernel(x_ref, a12_ref, b12_ref, a3_ref, b3_ref, out_ref):
    # x_ref:   (TB, K_pad)      flattened NHWC input tile (zero padded)
    # a12_ref: (K_pad, H_pad)   fused conv1|conv2 matrix (BN folded)
    # b12_ref: (1, H_pad)       fused bias (f32)
    # a3_ref:  (H_pad, N_pad)   block-diagonal conv3 matrix (BN folded)
    # b3_ref:  (1, N_pad)       conv3 bias (f32)
    # out_ref: (TB, N_pad)      flattened NHWC output tile (f32)
    x = x_ref[...]
    h = jnp.dot(x, a12_ref[...], preferred_element_type=jnp.float32)
    h = jnp.maximum(h + b12_ref[...], 0.0)                 # ReLU(BN(conv1|2))
    h = h.astype(a3_ref.dtype)
    y = jnp.dot(h, a3_ref[...], preferred_element_type=jnp.float32)
    y = jnp.maximum(y + b3_ref[...], 0.0)                  # ReLU(BN(conv3))
    out_ref[...] = y.astype(out_ref.dtype)


def _fold_bn(w, b, gamma, beta, mean, var):
    """Fold eval-mode BatchNorm into conv weight / bias (per out-channel)."""
    s = gamma / jnp.sqrt(var + BN_EPS)
    w_f = w * s.reshape((-1,) + (1,) * (w.ndim - 1))
    b_f = b * s + (beta - mean * s)
    return w_f, b_f


def conv_block_forward(x_nchw, params, *, compute_dtype=jnp.bfloat16,
                       tb_max=512):
    """x_nchw: (B, C_in, 3, 3) f32. Returns (B, C_out, 3, 3) f32 (NCHW)."""
    B, C_in, Hs, Ws = x_nchw.shape
    assert (Hs, Ws) == (3, 3), "kernel specialized to the 3x3 Qttt board"
    C_out = params["w1"].shape[0]

    # ---------------- glue: fold BN, build dense matrices ----------------
    w1f, b1f = _fold_bn(params["w1"], params["b1"], params["g1"],
                        params["be1"], params["m1"], params["v1"])
    w2f, b2f = _fold_bn(params["w2"], params["b2"], params["g2"],
                        params["be2"], params["m2"], params["v2"])
    w3f, b3f = _fold_bn(params["w3"], params["b3"], params["g3"],
                        params["be3"], params["m3"], params["v3"])

    K = HW * C_in              # flattened input width  (q*C_in + c)
    Hd = HW * 2 * C_out        # flattened cat width    (p*2C + ch)
    N = HW * C_out             # flattened output width (p*C_out + o)

    # A12[q*C_in+c, p*2C+o]: conv1 taps (o < C_out) and conv2 (o >= C_out),
    # column layout matches torch.cat([out1, out2], dim=1) per position p.
    A12 = jnp.zeros((K, Hd), jnp.float32)
    for p in range(HW):
        oh, ow = divmod(p, 3)
        c0 = p * 2 * C_out
        for kh in range(3):
            for kw in range(3):
                ih, iw = oh + kh - 1, ow + kw - 1
                if 0 <= ih < 3 and 0 <= iw < 3:
                    q = ih * 3 + iw
                    A12 = A12.at[q * C_in:(q + 1) * C_in,
                                 c0:c0 + C_out].set(w1f[:, :, kh, kw].T)
        A12 = A12.at[p * C_in:(p + 1) * C_in,
                     c0 + C_out:c0 + 2 * C_out].set(w2f.T)
    b12 = jnp.tile(jnp.concatenate([b1f, b2f]), HW)

    # A3: block-diagonal 1x1 conv over the concatenated channels.
    A3 = jnp.zeros((Hd, N), jnp.float32)
    for p in range(HW):
        A3 = A3.at[p * 2 * C_out:(p + 1) * 2 * C_out,
                   p * C_out:(p + 1) * C_out].set(w3f.T)
    b3v = jnp.tile(b3f, HW)

    # ---------------- pad to lane-dense (multiple-of-128) shapes ----------
    Kp, Hp, Np = _rup(K, 128), _rup(Hd, 128), _rup(N, 128)

    # ---------------- batch tiling ----------------------------------------
    if B <= tb_max:
        TB, Bp = B, B                 # single step; full-extent block is legal
    else:
        TB = tb_max                   # multiple of 8; fits v7x 64 MiB VMEM
        Bp = _rup(B, TB)

    x_flat = jnp.transpose(x_nchw, (0, 2, 3, 1)).reshape(B, K)   # NHWC flatten
    x_p = jnp.pad(x_flat, ((0, Bp - B), (0, Kp - K))).astype(compute_dtype)
    A12_p = jnp.pad(A12, ((0, Kp - K), (0, Hp - Hd))).astype(compute_dtype)
    b12_p = jnp.pad(b12, (0, Hp - Hd)).reshape(1, Hp)
    A3_p = jnp.pad(A3, ((0, Hp - Hd), (0, Np - N))).astype(compute_dtype)
    b3_p = jnp.pad(b3v, (0, Np - N)).reshape(1, Np)

    out = pl.pallas_call(
        conv_block_kernel,
        out_shape=jax.ShapeDtypeStruct((Bp, Np), jnp.float32),
        grid=(Bp // TB,),
        in_specs=[
            pl.BlockSpec((TB, Kp), lambda i: (i, 0)),
            pl.BlockSpec((Kp, Hp), lambda i: (0, 0)),
            pl.BlockSpec((1, Hp), lambda i: (0, 0)),
            pl.BlockSpec((Hp, Np), lambda i: (0, 0)),
            pl.BlockSpec((1, Np), lambda i: (0, 0)),
        ],
        out_specs=pl.BlockSpec((TB, Np), lambda i: (i, 0)),
        compiler_params=pltpu.CompilerParams(
            dimension_semantics=("parallel",)),
    )(x_p, A12_p, b12_p, A3_p, b3_p)

    out = out[:B, :N].reshape(B, 3, 3, C_out)        # (b, h, w, c)
    return jnp.transpose(out, (0, 3, 1, 2))          # back to NCHW


# ----------------------- pure-JAX reference (eval BN) ------------------------
def conv_block_reference(x, params):
    hp = jax.lax.Precision.HIGHEST

    def bn_relu(y, g, b, m, v):
        s = g / jnp.sqrt(v + BN_EPS)
        return jnp.maximum(
            y * s[None, :, None, None] + (b - m * s)[None, :, None, None], 0.0)

    y1 = jax.lax.conv_general_dilated(
        x, params["w1"], (1, 1), ((1, 1), (1, 1)),
        dimension_numbers=("NCHW", "OIHW", "NCHW"), precision=hp)
    y1 = bn_relu(y1 + params["b1"][None, :, None, None],
                 params["g1"], params["be1"], params["m1"], params["v1"])

    y2 = jnp.einsum("bchw,oc->bohw", x, params["w2"], precision=hp) \
        + params["b2"][None, :, None, None]
    y2 = bn_relu(y2, params["g2"], params["be2"], params["m2"], params["v2"])

    cat = jnp.concatenate([y1, y2], axis=1)
    y3 = jnp.einsum("bchw,oc->bohw", cat, params["w3"], precision=hp) \
        + params["b3"][None, :, None, None]
    return bn_relu(y3, params["g3"], params["be3"], params["m3"], params["v3"])


def make_params(key, c_in, c_out):
    ks = jax.random.split(key, 21)
    f32 = jnp.float32
    return {
        "w1": 0.1 * jax.random.normal(ks[0], (c_out, c_in, 3, 3), f32),
        "b1": 0.1 * jax.random.normal(ks[1], (c_out,), f32),
        "g1": 1.0 + 0.1 * jax.random.normal(ks[2], (c_out,), f32),
        "be1": 0.1 * jax.random.normal(ks[3], (c_out,), f32),
        "m1": 0.05 * jax.random.normal(ks[4], (c_out,), f32),
        "v1": 0.5 + jax.random.uniform(ks[5], (c_out,), f32),
        "w2": 0.1 * jax.random.normal(ks[6], (c_out, c_in), f32),
        "b2": 0.1 * jax.random.normal(ks[7], (c_out,), f32),
        "g2": 1.0 + 0.1 * jax.random.normal(ks[8], (c_out,), f32),
        "be2": 0.1 * jax.random.normal(ks[9], (c_out,), f32),
        "m2": 0.05 * jax.random.normal(ks[10], (c_out,), f32),
        "v2": 0.5 + jax.random.uniform(ks[11], (c_out,), f32),
        "w3": 0.1 * jax.random.normal(ks[12], (c_out, 2 * c_out), f32),
        "b3": 0.1 * jax.random.normal(ks[13], (c_out,), f32),
        "g3": 1.0 + 0.1 * jax.random.normal(ks[14], (c_out,), f32),
        "be3": 0.1 * jax.random.normal(ks[15], (c_out,), f32),
        "m3": 0.05 * jax.random.normal(ks[16], (c_out,), f32),
        "v3": 0.5 + jax.random.uniform(ks[17], (c_out,), f32),
    }


if __name__ == "__main__":
    B, C_IN, C_OUT = 2, 8, 24
    key = jax.random.PRNGKey(0)
    k_x, k_p = jax.random.split(key)

    x = jax.random.normal(k_x, (B, C_IN, 3, 3), jnp.float32)
    params = make_params(k_p, C_IN, C_OUT)

    ref = conv_block_reference(x, params)

    # f32 operand path (tight-ish check).
    out_f32 = jax.block_until_ready(
        conv_block_forward(x, params, compute_dtype=jnp.float32))
    assert out_f32.shape == (B, C_OUT, 3, 3), out_f32.shape
    assert jnp.allclose(out_f32, ref, atol=2e-2, rtol=2e-2), \
        float(jnp.max(jnp.abs(out_f32 - ref)))

    # Default bf16-operand / f32-accumulate path (looser tolerance).
    out_bf16 = jax.block_until_ready(conv_block_forward(x, params))
    assert jnp.allclose(out_bf16, ref, atol=6e-2, rtol=6e-2), \
        float(jnp.max(jnp.abs(out_bf16 - ref)))

    print("KERNEL_OK")
</pallas_src>

<mosaic_0001>
module attributes {stable_mosaic.version = 11 : i64} {
  func.func @conv_block_kernel(%arg0: i32, %arg1: memref<2x128xf32, #tpu.memory_space<vmem>>, %arg2: memref<128x512xf32, #tpu.memory_space<vmem>>, %arg3: memref<1x512xf32, #tpu.memory_space<vmem>>, %arg4: memref<512x256xf32, #tpu.memory_space<vmem>>, %arg5: memref<1x256xf32, #tpu.memory_space<vmem>>, %arg6: memref<2x256xf32, #tpu.memory_space<vmem>>) attributes {dimension_semantics = [#tpu.dimension_semantics<parallel>], iteration_bounds = array<i64: 1>, scalar_prefetch = 0 : i64, scratch_operands = 0 : i64, tpu.core_type = #tpu.core_type<tc>, window_params = [{transform_indices = @transform_0, window_bounds = array<i64: 2, 128>}, {pipeline_mode = #tpu.pipeline_mode<synchronous>, transform_indices = @transform_1, window_bounds = array<i64: 128, 512>}, {pipeline_mode = #tpu.pipeline_mode<synchronous>, transform_indices = @transform_2, window_bounds = array<i64: 1, 512>}, {pipeline_mode = #tpu.pipeline_mode<synchronous>, transform_indices = @transform_3, window_bounds = array<i64: 512, 256>}, {pipeline_mode = #tpu.pipeline_mode<synchronous>, transform_indices = @transform_4, window_bounds = array<i64: 1, 256>}, {transform_indices = @transform_5, window_bounds = array<i64: 2, 256>}]} {
    %c0 = arith.constant 0 : index
    %c0_0 = arith.constant 0 : index
    %0 = vector.load %arg1[%c0, %c0_0] : memref<2x128xf32, #tpu.memory_space<vmem>>, vector<2x128xf32>
    %c0_1 = arith.constant 0 : index
    %c0_2 = arith.constant 0 : index
    %1 = vector.load %arg2[%c0_1, %c0_2] : memref<128x512xf32, #tpu.memory_space<vmem>>, vector<128x512xf32>
    %cst = arith.constant dense<0.000000e+00> : vector<2x512xf32>
    %2 = tpu.matmul %0, %1, %cst {dimension_numbers = #tpu.dot_dimension_numbers<[1], [0], [0], [1], [0, 0, 1, 1], [], []>} : vector<2x128xf32>, vector<128x512xf32>, vector<2x512xf32> -> vector<2x512xf32>
    %c0_3 = arith.constant 0 : index
    %c0_4 = arith.constant 0 : index
    %3 = vector.load %arg3[%c0_3, %c0_4] : memref<1x512xf32, #tpu.memory_space<vmem>>, vector<1x512xf32>
    %4 = vector.broadcast %3 : vector<1x512xf32> to vector<2x512xf32>
    %5 = arith.addf %2, %4 : vector<2x512xf32>
    %cst_5 = arith.constant 0.000000e+00 : f32
    %6 = vector.broadcast %cst_5 : f32 to vector<2x512xf32>
    %7 = arith.maximumf %5, %6 : vector<2x512xf32>
    %c0_6 = arith.constant 0 : index
    %c0_7 = arith.constant 0 : index
    %8 = vector.load %arg4[%c0_6, %c0_7] : memref<512x256xf32, #tpu.memory_space<vmem>>, vector<512x256xf32>
    %cst_8 = arith.constant dense<0.000000e+00> : vector<2x256xf32>
    %9 = tpu.matmul %7, %8, %cst_8 {dimension_numbers = #tpu.dot_dimension_numbers<[1], [0], [0], [1], [0, 0, 1, 1], [], []>} : vector<2x512xf32>, vector<512x256xf32>, vector<2x256xf32> -> vector<2x256xf32>
    %c0_9 = arith.constant 0 : index
    %c0_10 = arith.constant 0 : index
    %10 = vector.load %arg5[%c0_9, %c0_10] : memref<1x256xf32, #tpu.memory_space<vmem>>, vector<1x256xf32>
    %11 = vector.broadcast %10 : vector<1x256xf32> to vector<2x256xf32>
    %12 = arith.addf %9, %11 : vector<2x256xf32>
    %cst_11 = arith.constant 0.000000e+00 : f32
    %13 = vector.broadcast %cst_11 : f32 to vector<2x256xf32>
    %14 = arith.maximumf %12, %13 : vector<2x256xf32>
    %c0_12 = arith.constant 0 : index
    %c0_13 = arith.constant 0 : index
    %15 = vector.load %arg6[%c0_12, %c0_13] : memref<2x256xf32, #tpu.memory_space<vmem>>, vector<2x256xf32>
    tpu.vector_store %arg6[%c0_12, %c0_13], %14 {strides = array<i32>} : memref<2x256xf32, #tpu.memory_space<vmem>>, vector<2x256xf32>,
    return
  }
  func.func @transform_0(%arg0: i32) -> (i32, i32) {
    %c0_i32 = arith.constant 0 : i32
    %c0_i32_0 = arith.constant 0 : i32
    return %arg0, %c0_i32 : i32, i32
  }
  func.func @transform_1(%arg0: i32) -> (i32, i32) {
    %c0_i32 = arith.constant 0 : i32
    %c0_i32_0 = arith.constant 0 : i32
    %c0_i32_1 = arith.constant 0 : i32
    return %c0_i32, %c0_i32_0 : i32, i32
  }
  func.func @transform_2(%arg0: i32) -> (i32, i32) {
    %c0_i32 = arith.constant 0 : i32
    %c0_i32_0 = arith.constant 0 : i32
    %c0_i32_1 = arith.constant 0 : i32
    return %c0_i32, %c0_i32_0 : i32, i32
  }
  func.func @transform_3(%arg0: i32) -> (i32, i32) {
    %c0_i32 = arith.constant 0 : i32
    %c0_i32_0 = arith.constant 0 : i32
    %c0_i32_1 = arith.constant 0 : i32
    return %c0_i32, %c0_i32_0 : i32, i32
  }
  func.func @transform_4(%arg0: i32) -> (i32, i32) {
    %c0_i32 = arith.constant 0 : i32
    %c0_i32_0 = arith.constant 0 : i32
    %c0_i32_1 = arith.constant 0 : i32
    return %c0_i32, %c0_i32_0 : i32, i32
  }
  func.func @transform_5(%arg0: i32) -> (i32, i32) {
    %c0_i32 = arith.constant 0 : i32
    %c0_i32_0 = arith.constant 0 : i32
    return %arg0, %c0_i32 : i32, i32
  }
}

</mosaic_0001>

<llo_original>
// kernel: tpu_custom_call.1
$region0: #{tpu_custom_call.1}
  #allocation0 [shape = 'u32[]', space=smem, size = 0x4, offset = 0x4, fixed_abs, tag = 'smem constant byte address 0x4 - core index']
  #allocation1 [shape = 'u32[144,128]{1,0:T(1,128)}', space=vmem, size = 0x12000, scoped, tag = 'internal scratch']
  %s0 = inlined_call_operand.hbm [shape: f32[2,128], index: 0, kind: input, shape index: {}]
  %s1 = inlined_call_operand.hbm [shape: f32[128,512], index: 1, kind: input, shape index: {}]
  %s2 = inlined_call_operand.hbm [shape: f32[1,512], index: 2, kind: input, shape index: {}]
  %s3 = inlined_call_operand.hbm [shape: f32[512,256], index: 3, kind: input, shape index: {}]
  %s4 = inlined_call_operand.vmem [shape: f32[1,256], index: 4, kind: input, shape index: {}]
  %s5 = inlined_call_operand.hbm [shape: f32[2,256], index: 5, kind: output, shape index: {}]
  %s6 = sld [smem:[#allocation0]]
  $region46: #{tpu_custom_call.1} parent=0
    _
  %s8 = ssub.s32 1, %s6
  %s9 = scalar_select 0, %s8, %s6
  $region1: #{tpu_custom_call.1} parent=0
    #allocation2 [shape = 'u8[1024]{0}', space=vmem, size = 0x400, scoped, tag = 'input window, operand 0, single buffered']
    #allocation3 [shape = 's32[1]{0}', space=sflag, size = 0x4, scoped, tag = 'scoped memory for tpu_custom_call.1']
    #allocation4 [shape = 's32[1]{0}', space=sflag, size = 0x4, scoped, tag = 'scoped memory for tpu_custom_call.1']
    #allocation5 [shape = 'u8[262144]{0}', space=vmem, size = 0x40000, scoped, tag = 'input window, operand 1, single buffered']
    #allocation6 [shape = 's32[1]{0}', space=sflag, size = 0x4, scoped, tag = 'scoped memory for tpu_custom_call.1']
    #allocation7 [shape = 'u8[2048]{0}', space=vmem, size = 0x800, scoped, tag = 'input window, operand 2, single buffered']
    #allocation8 [shape = 'u8[524288]{0}', space=vmem, size = 0x80000, scoped, tag = 'input window, operand 3, single buffered']
    #allocation9 [shape = 's32[1]{0}', space=sflag, size = 0x4, scoped, tag = 'scoped memory for tpu_custom_call.1']
    #allocation10 [shape = 'u8[2048]{0}', space=vmem, size = 0x800, scoped, tag = 'output window, operand 0, single buffered']
    %10 = vsyncpa [#allocation3], 0
    %11 = vsyncpa [#allocation6], 0
    %12 = vsyncpa [#allocation9], 0
    %13 = vsyncpa [#allocation4], 0
    // Predicated region
    $region2: #{tpu_custom_call.1} parent=1 // pred_check
      _
    $region3: #{tpu_custom_call.1} parent=1 // pred_check_branch
      %15 = sbr.rel (0) target = $region5
    $region4: #{tpu_custom_call.1} parent=1 // pred_region
      %s17 = ssub.s32 32, 32
      %18 = vsyncadd [#allocation3], %s17
      %s20 = sshll.u32 [#allocation2], 4
      %s21 = int_to_ptr.vmem [resolvable:$true] %s20
      %23 = dma.hbm_to_vmem [thread:$0]  %s0, 32, %s21, [#allocation3]
    $region5: #{tpu_custom_call.1} parent=1 // pred_fallthru
      _
    // Predicated region
    $region6: #{tpu_custom_call.1} parent=1 // pred_check
      _
    $region7: #{tpu_custom_call.1} parent=1 // pred_check_branch
      %25 = sbr.rel (0) target = $region9
    $region8: #{tpu_custom_call.1} parent=1 // pred_region
      %s27 = ssub.s32 8192, 8192
      %28 = vsyncadd [#allocation6], %s27
      %s29 = sshll.u32 [#allocation5], 4
      %s30 = int_to_ptr.vmem [resolvable:$true] %s29
      %35 = dma.hbm_to_vmem [thread:$0]  %s1, 8192, %s30, [#allocation6], 512, 512, 32
    $region9: #{tpu_custom_call.1} parent=1 // pred_fallthru
      _
    // Predicated region
    $region10: #{tpu_custom_call.1} parent=1 // pred_check
      _
    $region11: #{tpu_custom_call.1} parent=1 // pred_check_branch
      %37 = sbr.rel (0) target = $region13
    $region12: #{tpu_custom_call.1} parent=1 // pred_region
      %s39 = ssub.s32 64, 64
      %40 = vsyncadd [#allocation6], %s39
      %s42 = sshll.u32 [#allocation7], 4
      %s43 = int_to_ptr.vmem [resolvable:$true] %s42
      %45 = dma.hbm_to_vmem [thread:$0]  %s2, 64, %s43, [#allocation6]
    $region13: #{tpu_custom_call.1} parent=1 // pred_fallthru
      _
    // Predicated region
    $region14: #{tpu_custom_call.1} parent=1 // pred_check
      _
    $region15: #{tpu_custom_call.1} parent=1 // pred_check_branch
      %47 = sbr.rel (0) target = $region17
    $region16: #{tpu_custom_call.1} parent=1 // pred_region
      %s49 = ssub.s32 16384, 16384
      %50 = vsyncadd [#allocation9], %s49
      %s51 = sshll.u32 [#allocation8], 4
      %s52 = int_to_ptr.vmem [resolvable:$true] %s51
      %57 = dma.hbm_to_vmem [thread:$0]  %s3, 16384, %s52, [#allocation9], 256, 256, 16
    $region17: #{tpu_custom_call.1} parent=1 // pred_fallthru
      _
    // Predicated region
    $region18: #{tpu_custom_call.1} parent=1 // pred_check
      _
    $region19: #{tpu_custom_call.1} parent=1 // pred_check_branch
      %59 = sbr.rel (0) target = $region21
    $region20: #{tpu_custom_call.1} parent=1 // pred_region
      _
    $region21: #{tpu_custom_call.1} parent=1 // pred_fallthru
      _
    // Predicated region
    $region22: #{tpu_custom_call.1} parent=1 // pred_check
      _
    $region23: #{tpu_custom_call.1} parent=1 // pred_check_branch
      %61 = sbr.rel (0) target = $region25
    $region24: #{tpu_custom_call.1} parent=1 // pred_region
      %62 = dma.done [#allocation3], 32
    $region25: #{tpu_custom_call.1} parent=1 // pred_fallthru
      _
    // Predicated region
    $region26: #{tpu_custom_call.1} parent=1 // pred_check
      _
    $region27: #{tpu_custom_call.1} parent=1 // pred_check_branch
      %64 = sbr.rel (0) target = $region29
    $region28: #{tpu_custom_call.1} parent=1 // pred_region
      %65 = dma.done [#allocation6], 8192
    $region29: #{tpu_custom_call.1} parent=1 // pred_fallthru
      _
    // Predicated region
    $region30: #{tpu_custom_call.1} parent=1 // pred_check
      _
    $region31: #{tpu_custom_call.1} parent=1 // pred_check_branch
      %67 = sbr.rel (0) target = $region33
    $region32: #{tpu_custom_call.1} parent=1 // pred_region
      %68 = dma.done [#allocation6], 64
    $region33: #{tpu_custom_call.1} parent=1 // pred_fallthru
      _
    // Predicated region
    $region34: #{tpu_custom_call.1} parent=1 // pred_check
      _
    $region35: #{tpu_custom_call.1} parent=1 // pred_check_branch
      %70 = sbr.rel (0) target = $region37
    $region36: #{tpu_custom_call.1} parent=1 // pred_region
      %71 = dma.done [#allocation9], 16384
    $region37: #{tpu_custom_call.1} parent=1 // pred_fallthru
      _
    %v72 = vld [vmem:[#allocation2] sm:$0x3]
    %v73 = vld [vmem:[#allocation5] sm:$0xff]
    %v74 = vld [vmem:[#allocation5 + $0x8] sm:$0xff]
    %v75 = vld [vmem:[#allocation5 + $0x10] sm:$0xff]
    %v76 = vld [vmem:[#allocation5 + $0x18] sm:$0xff]
    %v77 = vld [vmem:[#allocation5 + $0x20] sm:$0xff]
    %v78 = vld [vmem:[#allocation5 + $0x28] sm:$0xff]
    %v79 = vld [vmem:[#allocation5 + $0x30] sm:$0xff]
    %v80 = vld [vmem:[#allocation5 + $0x38] sm:$0xff]
    %v81 = vld [vmem:[#allocation5 + $0x40] sm:$0xff]
    %v82 = vld [vmem:[#allocation5 + $0x48] sm:$0xff]
    %v83 = vld [vmem:[#allocation5 + $0x50] sm:$0xff]
    %v84 = vld [vmem:[#allocation5 + $0x58] sm:$0xff]
    %v85 = vld [vmem:[#allocation5 + $0x60] sm:$0xff]
    %v86 = vld [vmem:[#allocation5 + $0x68] sm:$0xff]
    %v87 = vld [vmem:[#allocation5 + $0x70] sm:$0xff]
    %v88 = vld [vmem:[#allocation5 + $0x78] sm:$0xff]
    %v89 = vld [vmem:[#allocation5 + $0x80] sm:$0xff]
    %v90 = vld [vmem:[#allocation5 + $0x88] sm:$0xff]
    %v91 = vld [vmem:[#allocation5 + $0x90] sm:$0xff]
    %v92 = vld [vmem:[#allocation5 + $0x98] sm:$0xff]
    %v93 = vld [vmem:[#allocation5 + $0xa0] sm:$0xff]
    %v94 = vld [vmem:[#allocation5 + $0xa8] sm:$0xff]
    %v95 = vld [vmem:[#allocation5 + $0xb0] sm:$0xff]
    %v96 = vld [vmem:[#allocation5 + $0xb8] sm:$0xff]
    %v97 = vld [vmem:[#allocation5 + $0xc0] sm:$0xff]
    %v98 = vld [vmem:[#allocation5 + $0xc8] sm:$0xff]
    %v99 = vld [vmem:[#allocation5 + $0xd0] sm:$0xff]
    %v100 = vld [vmem:[#allocation5 + $0xd8] sm:$0xff]
    %v101 = vld [vmem:[#allocation5 + $0xe0] sm:$0xff]
    %v102 = vld [vmem:[#allocation5 + $0xe8] sm:$0xff]
    %v103 = vld [vmem:[#allocation5 + $0xf0] sm:$0xff]
    %v104 = vld [vmem:[#allocation5 + $0xf8] sm:$0xff]
    %v105 = vld [vmem:[#allocation5 + $0x100] sm:$0xff]
    %v106 = vld [vmem:[#allocation5 + $0x108] sm:$0xff]
    %v107 = vld [vmem:[#allocation5 + $0x110] sm:$0xff]
    %v108 = vld [vmem:[#allocation5 + $0x118] sm:$0xff]
    %v109 = vld [vmem:[#allocation5 + $0x120] sm:$0xff]
    %v110 = vld [vmem:[#allocation5 + $0x128] sm:$0xff]
    %v111 = vld [vmem:[#allocation5 + $0x130] sm:$0xff]
    %v112 = vld [vmem:[#allocation5 + $0x138] sm:$0xff]
    %v113 = vld [vmem:[#allocation5 + $0x140] sm:$0xff]
    %v114 = vld [vmem:[#allocation5 + $0x148] sm:$0xff]
    %v115 = vld [vmem:[#allocation5 + $0x150] sm:$0xff]
    %v116 = vld [vmem:[#allocation5 + $0x158] sm:$0xff]
    %v117 = vld [vmem:[#allocation5 + $0x160] sm:$0xff]
    %v118 = vld [vmem:[#allocation5 + $0x168] sm:$0xff]
    %v119 = vld [vmem:[#allocation5 + $0x170] sm:$0xff]
    %v120 = vld [vmem:[#allocation5 + $0x178] sm:$0xff]
    %v121 = vld [vmem:[#allocation5 + $0x180] sm:$0xff]
    %v122 = vld [vmem:[#allocation5 + $0x188] sm:$0xff]
    %v123 = vld [vmem:[#allocation5 + $0x190] sm:$0xff]
    %v124 = vld [vmem:[#allocation5 + $0x198] sm:$0xff]
    %v125 = vld [vmem:[#allocation5 + $0x1a0] sm:$0xff]
    %v126 = vld [vmem:[#allocation5 + $0x1a8] sm:$0xff]
    %v127 = vld [vmem:[#allocation5 + $0x1b0] sm:$0xff]
    %v128 = vld [vmem:[#allocation5 + $0x1b8] sm:$0xff]
    %v129 = vld [vmem:[#allocation5 + $0x1c0] sm:$0xff]
    %v130 = vld [vmem:[#allocation5 + $0x1c8] sm:$0xff]
    %v131 = vld [vmem:[#allocation5 + $0x1d0] sm:$0xff]
    %v132 = vld [vmem:[#allocation5 + $0x1d8] sm:$0xff]
    %v133 = vld [vmem:[#allocation5 + $0x1e0] sm:$0xff]
    %v134 = vld [vmem:[#allocation5 + $0x1e8] sm:$0xff]
    %v135 = vld [vmem:[#allocation5 + $0x1f0] sm:$0xff]
    %v136 = vld [vmem:[#allocation5 + $0x1f8] sm:$0xff]
    %v137 = vld [vmem:[#allocation7] sm:$0xf]
    %v139 = vlaneseq
    %v140 = vshrl.u32 %v139, 7
    %v141 = vsub.s32 0, %v140
    %v142 = vrot.slane %v137, %v141
    %v143 = vlaneseq
    %v144 = vshrl.u32 %v143, 7
    %v145 = vsub.s32 1, %v144
    %v146 = vrot.slane %v137, %v145
    %v147 = vlaneseq
    %v148 = vshrl.u32 %v147, 7
    %v149 = vsub.s32 2, %v148
    %v150 = vrot.slane %v137, %v149
    %v151 = vlaneseq
    %v152 = vshrl.u32 %v151, 7
    %v153 = vsub.s32 3, %v152
    %v154 = vrot.slane %v137, %v153
    %159 = vmatprep.subr.mxu0 %v134
    %160 = vmatpush1.msra.mxu0 %v133
    %161 = vmatprep.subr.mxu0 %v130
    %162 = vmatpush1.msra.mxu0 %v129
    %163 = vmatprep.subr.mxu0 %v126
    %164 = vmatpush1.msra.mxu0 %v125
    %165 = vmatprep.subr.mxu0 %v122
    %166 = vmatpush1.msra.mxu0 %v121
    %167 = vmatprep.subr.mxu0 %v118
    %168 = vmatpush1.msra.mxu0 %v117
    %169 = vmatprep.subr.mxu0 %v114
    %170 = vmatpush1.msra.mxu0 %v113
    %171 = vmatprep.subr.mxu0 %v110
    %172 = vmatpush1.msra.mxu0 %v109
    %173 = vmatprep.subr.mxu0 %v106
    %174 = vmatpush1.msra.mxu0 %v105
    %175 = vmatprep.subr.mxu0 %v102
    %176 = vmatpush1.msra.mxu0 %v101
    %177 = vmatprep.subr.mxu0 %v98
    %178 = vmatpush1.msra.mxu0 %v97
    %179 = vmatprep.subr.mxu0 %v94
    %180 = vmatpush1.msra.mxu0 %v93
    %181 = vmatprep.subr.mxu0 %v90
    %182 = vmatpush1.msra.mxu0 %v89
    %183 = vmatprep.subr.mxu0 %v86
    %184 = vmatpush1.msra.mxu0 %v85
    %185 = vmatprep.subr.mxu0 %v82
    %186 = vmatpush1.msra.mxu0 %v81
    %187 = vmatprep.subr.mxu0 %v78
    %188 = vmatpush1.msra.mxu0 %v77
    %189 = vmatprep.subr.mxu0 %v74
    %190 = vmatpush1.msra.mxu0 %v73
    %191 = vmatprep.subr.mxu0 0.0
    %192 = vmatpush2.msra.mxu0 0.0
    %193 = vmatprep.subr.mxu0 0.0
    %194 = vmatpush2.msra.mxu0 0.0
    %195 = vmatprep.subr.mxu0 0.0
    %196 = vmatpush2.msra.mxu0 0.0
    %197 = vmatprep.subr.mxu0 0.0
    %198 = vmatpush2.msra.mxu0 0.0
    %199 = vmatprep.subr.mxu0 0.0
    %200 = vmatpush2.msra.mxu0 0.0
    %201 = vmatprep.subr.mxu0 0.0
    %202 = vmatpush2.msra.mxu0 0.0
    %203 = vmatprep.subr.mxu0 0.0
    %204 = vmatpush2.msra.mxu0 0.0
    %205 = vmatprep.subr.mxu0 0.0
    %206 = vmatpush2.msra.mxu0 0.0
    %207 = vmatprep.subr.mxu0 0.0
    %208 = vmatpush2.msra.mxu0 0.0
    %209 = vmatprep.subr.mxu0 0.0
    %210 = vmatpush2.msra.mxu0 0.0
    %211 = vmatprep.subr.mxu0 0.0
    %212 = vmatpush2.msra.mxu0 0.0
    %213 = vmatprep.subr.mxu0 0.0
    %214 = vmatpush2.msra.mxu0 0.0
    %215 = vmatprep.subr.mxu0 0.0
    %216 = vmatpush2.msra.mxu0 0.0
    %217 = vmatprep.subr.mxu0 0.0
    %218 = vmatpush2.msra.mxu0 0.0
    %219 = vmatprep.subr.mxu0 0.0
    %220 = vmatpush2.msra.mxu0 0.0
    %221 = vmatprep.subr.mxu0 0.0
    %222 = vmatpush2.msra.mxu0 0.0
    %223 = vmatprep.mubr.f32.mxu0 0.0
    %224 = vmatmul.mubr.f32.gmra.mxu0 %v72
    %v225 = vpop.f32.mrf.mxu0
    %v226 = vadd.f32 %v142, %v225
    %v227 = vpop.f32.mrf.mxu0
    %v228 = vadd.f32 %v146, %v227
    %229 = vdwg.mxu0
    %230 = vmatprep.subr.mxu0 %v136
    %231 = vmatpush1.msra.mxu0 %v135
    %232 = vmatprep.subr.mxu0 %v132
    %233 = vmatpush1.msra.mxu0 %v131
    %234 = vmatprep.subr.mxu0 %v128
    %235 = vmatpush1.msra.mxu0 %v127
    %236 = vmatprep.subr.mxu0 %v124
    %237 = vmatpush1.msra.mxu0 %v123
    %238 = vmatprep.subr.mxu0 %v120
    %239 = vmatpush1.msra.mxu0 %v119
    %240 = vmatprep.subr.mxu0 %v116
    %241 = vmatpush1.msra.mxu0 %v115
    %242 = vmatprep.subr.mxu0 %v112
    %243 = vmatpush1.msra.mxu0 %v111
    %244 = vmatprep.subr.mxu0 %v108
    %245 = vmatpush1.msra.mxu0 %v107
    %246 = vmatprep.subr.mxu0 %v104
    %247 = vmatpush1.msra.mxu0 %v103
    %248 = vmatprep.subr.mxu0 %v100
    %249 = vmatpush1.msra.mxu0 %v99
    %250 = vmatprep.subr.mxu0 %v96
    %251 = vmatpush1.msra.mxu0 %v95
    %252 = vmatprep.subr.mxu0 %v92
    %253 = vmatpush1.msra.mxu0 %v91
    %254 = vmatprep.subr.mxu0 %v88
    %255 = vmatpush1.msra.mxu0 %v87
    %256 = vmatprep.subr.mxu0 %v84
    %257 = vmatpush1.msra.mxu0 %v83
    %258 = vmatprep.subr.mxu0 %v80
    %259 = vmatpush1.msra.mxu0 %v79
    %260 = vmatprep.subr.mxu0 %v76
    %261 = vmatpush1.msra.mxu0 %v75
    %262 = vmatprep.subr.mxu0 0.0
    %263 = vmatpush2.msra.mxu0 0.0
    %264 = vmatprep.subr.mxu0 0.0
    %265 = vmatpush2.msra.mxu0 0.0
    %266 = vmatprep.subr.mxu0 0.0
    %267 = vmatpush2.msra.mxu0 0.0
    %268 = vmatprep.subr.mxu0 0.0
    %269 = vmatpush2.msra.mxu0 0.0
    %270 = vmatprep.subr.mxu0 0.0
    %271 = vmatpush2.msra.mxu0 0.0
    %272 = vmatprep.subr.mxu0 0.0
    %273 = vmatpush2.msra.mxu0 0.0
    %274 = vmatprep.subr.mxu0 0.0
    %275 = vmatpush2.msra.mxu0 0.0
    %276 = vmatprep.subr.mxu0 0.0
    %277 = vmatpush2.msra.mxu0 0.0
    %278 = vmatprep.subr.mxu0 0.0
    %279 = vmatpush2.msra.mxu0 0.0
    %280 = vmatprep.subr.mxu0 0.0
    %281 = vmatpush2.msra.mxu0 0.0
    %282 = vmatprep.subr.mxu0 0.0
    %283 = vmatpush2.msra.mxu0 0.0
    %284 = vmatprep.subr.mxu0 0.0
    %285 = vmatpush2.msra.mxu0 0.0
    %286 = vmatprep.subr.mxu0 0.0
    %287 = vmatpush2.msra.mxu0 0.0
    %288 = vmatprep.subr.mxu0 0.0
    %289 = vmatpush2.msra.mxu0 0.0
    %290 = vmatprep.subr.mxu0 0.0
    %291 = vmatpush2.msra.mxu0 0.0
    %292 = vmatprep.subr.mxu0 0.0
    %293 = vmatpush2.msra.mxu0 0.0
    %294 = vmatprep.mubr.f32.mxu0 0.0
    %295 = vmatmul.mubr.f32.gmra.mxu0 %v72
    %v296 = vpop.f32.mrf.mxu0
    %v297 = vadd.f32 %v150, %v296
    %v298 = vpop.f32.mrf.mxu0
    %v299 = vadd.f32 %v154, %v298
    %300 = vdwg.mxu0
    %v301 = vmax.f32 %v226, 0.0
    %v302 = vmax.f32 %v228, 0.0
    %v303 = vmax.f32 %v297, 0.0
    %v304 = vmax.f32 %v299, 0.0
    %v305 = vld [vmem:[#allocation8] sm:$0xff]
    %v306 = vld [vmem:[#allocation8 + $0x8] sm:$0xff]
    %v307 = vld [vmem:[#allocation8 + $0x10] sm:$0xff]
    %v308 = vld [vmem:[#allocation8 + $0x18] sm:$0xff]
    %v309 = vld [vmem:[#allocation8 + $0x20] sm:$0xff]
    %v310 = vld [vmem:[#allocation8 + $0x28] sm:$0xff]
    %v311 = vld [vmem:[#allocation8 + $0x30] sm:$0xff]
    %v312 = vld [vmem:[#allocation8 + $0x38] sm:$0xff]
    %v313 = vld [vmem:[#allocation8 + $0x40] sm:$0xff]
    %v314 = vld [vmem:[#allocation8 + $0x48] sm:$0xff]
    %v315 = vld [vmem:[#allocation8 + $0x50] sm:$0xff]
    %v316 = vld [vmem:[#allocation8 + $0x58] sm:$0xff]
    %v317 = vld [vmem:[#allocation8 + $0x60] sm:$0xff]
    %v318 = vld [vmem:[#allocation8 + $0x68] sm:$0xff]
    %v319 = vld [vmem:[#allocation8 + $0x70] sm:$0xff]
    %v320 = vld [vmem:[#allocation8 + $0x78] sm:$0xff]
    %v321 = vld [vmem:[#allocation8 + $0x80] sm:$0xff]
    %v322 = vld [vmem:[#allocation8 + $0x88] sm:$0xff]
    %v323 = vld [vmem:[#allocation8 + $0x90] sm:$0xff]
    %v324 = vld [vmem:[#allocation8 + $0x98] sm:$0xff]
    %v325 = vld [vmem:[#allocation8 + $0xa0] sm:$0xff]
    %v326 = vld [vmem:[#allocation8 + $0xa8] sm:$0xff]
    %v327 = vld [vmem:[#allocation8 + $0xb0] sm:$0xff]
    %v328 = vld [vmem:[#allocation8 + $0xb8] sm:$0xff]
    %v329 = vld [vmem:[#allocation8 + $0xc0] sm:$0xff]
    %v330 = vld [vmem:[#allocation8 + $0xc8] sm:$0xff]
    %v331 = vld [vmem:[#allocation8 + $0xd0] sm:$0xff]
    %v332 = vld [vmem:[#allocation8 + $0xd8] sm:$0xff]
    %v333 = vld [vmem:[#allocation8 + $0xe0] sm:$0xff]
    %v334 = vld [vmem:[#allocation8 + $0xe8] sm:$0xff]
    %v335 = vld [vmem:[#allocation8 + $0xf0] sm:$0xff]
    %v336 = vld [vmem:[#allocation8 + $0xf8] sm:$0xff]
    %v337 = vld [vmem:[#allocation8 + $0x100] sm:$0xff]
    %v338 = vld [vmem:[#allocation8 + $0x108] sm:$0xff]
    %v339 = vld [vmem:[#allocation8 + $0x110] sm:$0xff]
    %v340 = vld [vmem:[#allocation8 + $0x118] sm:$0xff]
    %v341 = vld [vmem:[#allocation8 + $0x120] sm:$0xff]
    %v342 = vld [vmem:[#allocation8 + $0x128] sm:$0xff]
    %v343 = vld [vmem:[#allocation8 + $0x130] sm:$0xff]
    %v344 = vld [vmem:[#allocation8 + $0x138] sm:$0xff]
    %v345 = vld [vmem:[#allocation8 + $0x140] sm:$0xff]
    %v346 = vld [vmem:[#allocation8 + $0x148] sm:$0xff]
    %v347 = vld [vmem:[#allocation8 + $0x150] sm:$0xff]
    %v348 = vld [vmem:[#allocation8 + $0x158] sm:$0xff]
    %v349 = vld [vmem:[#allocation8 + $0x160] sm:$0xff]
    %v350 = vld [vmem:[#allocation8 + $0x168] sm:$0xff]
    %v351 = vld [vmem:[#allocation8 + $0x170] sm:$0xff]
    %v352 = vld [vmem:[#allocation8 + $0x178] sm:$0xff]
    %v353 = vld [vmem:[#allocation8 + $0x180] sm:$0xff]
    %v354 = vld [vmem:[#allocation8 + $0x188] sm:$0xff]
    %v355 = vld [vmem:[#allocation8 + $0x190] sm:$0xff]
    %v356 = vld [vmem:[#allocation8 + $0x198] sm:$0xff]
    %v357 = vld [vmem:[#allocation8 + $0x1a0] sm:$0xff]
    %v358 = vld [vmem:[#allocation8 + $0x1a8] sm:$0xff]
    %v359 = vld [vmem:[#allocation8 + $0x1b0] sm:$0xff]
    %v360 = vld [vmem:[#allocation8 + $0x1b8] sm:$0xff]
    %v361 = vld [vmem:[#allocation8 + $0x1c0] sm:$0xff]
    %v362 = vld [vmem:[#allocation8 + $0x1c8] sm:$0xff]
    %v363 = vld [vmem:[#allocation8 + $0x1d0] sm:$0xff]
    %v364 = vld [vmem:[#allocation8 + $0x1d8] sm:$0xff]
    %v365 = vld [vmem:[#allocation8 + $0x1e0] sm:$0xff]
    %v366 = vld [vmem:[#allocation8 + $0x1e8] sm:$0xff]
    %v367 = vld [vmem:[#allocation8 + $0x1f0] sm:$0xff]
    %v368 = vld [vmem:[#allocation8 + $0x1f8] sm:$0xff]
    %v369 = vld [vmem:[#allocation8 + $0x200] sm:$0xff]
    %v370 = vld [vmem:[#allocation8 + $0x208] sm:$0xff]
    %v371 = vld [vmem:[#allocation8 + $0x210] sm:$0xff]
    %v372 = vld [vmem:[#allocation8 + $0x218] sm:$0xff]
    %v373 = vld [vmem:[#allocation8 + $0x220] sm:$0xff]
    %v374 = vld [vmem:[#allocation8 + $0x228] sm:$0xff]
    %v375 = vld [vmem:[#allocation8 + $0x230] sm:$0xff]
    %v376 = vld [vmem:[#allocation8 + $0x238] sm:$0xff]
    %v377 = vld [vmem:[#allocation8 + $0x240] sm:$0xff]
    %v378 = vld [vmem:[#allocation8 + $0x248] sm:$0xff]
    %v379 = vld [vmem:[#allocation8 + $0x250] sm:$0xff]
    %v380 = vld [vmem:[#allocation8 + $0x258] sm:$0xff]
    %v381 = vld [vmem:[#allocation8 + $0x260] sm:$0xff]
    %v382 = vld [vmem:[#allocation8 + $0x268] sm:$0xff]
    %v383 = vld [vmem:[#allocation8 + $0x270] sm:$0xff]
    %v384 = vld [vmem:[#allocation8 + $0x278] sm:$0xff]
    %v385 = vld [vmem:[#allocation8 + $0x280] sm:$0xff]
    %v386 = vld [vmem:[#allocation8 + $0x288] sm:$0xff]
    %v387 = vld [vmem:[#allocation8 + $0x290] sm:$0xff]
    %v388 = vld [vmem:[#allocation8 + $0x298] sm:$0xff]
    %v389 = vld [vmem:[#allocation8 + $0x2a0] sm:$0xff]
    %v390 = vld [vmem:[#allocation8 + $0x2a8] sm:$0xff]
    %v391 = vld [vmem:[#allocation8 + $0x2b0] sm:$0xff]
    %v392 = vld [vmem:[#allocation8 + $0x2b8] sm:$0xff]
    %v393 = vld [vmem:[#allocation8 + $0x2c0] sm:$0xff]
    %v394 = vld [vmem:[#allocation8 + $0x2c8] sm:$0xff]
    %v395 = vld [vmem:[#allocation8 + $0x2d0] sm:$0xff]
    %v396 = vld [vmem:[#allocation8 + $0x2d8] sm:$0xff]
    %v397 = vld [vmem:[#allocation8 + $0x2e0] sm:$0xff]
    %v398 = vld [vmem:[#allocation8 + $0x2e8] sm:$0xff]
    %v399 = vld [vmem:[#allocation8 + $0x2f0] sm:$0xff]
    %v400 = vld [vmem:[#allocation8 + $0x2f8] sm:$0xff]
    %v401 = vld [vmem:[#allocation8 + $0x300] sm:$0xff]
    %v402 = vld [vmem:[#allocation8 + $0x308] sm:$0xff]
    %v403 = vld [vmem:[#allocation8 + $0x310] sm:$0xff]
    %v404 = vld [vmem:[#allocation8 + $0x318] sm:$0xff]
    %v405 = vld [vmem:[#allocation8 + $0x320] sm:$0xff]
    %v406 = vld [vmem:[#allocation8 + $0x328] sm:$0xff]
    %v407 = vld [vmem:[#allocation8 + $0x330] sm:$0xff]
    %v408 = vld [vmem:[#allocation8 + $0x338] sm:$0xff]
    %v409 = vld [vmem:[#allocation8 + $0x340] sm:$0xff]
    %v410 = vld [vmem:[#allocation8 + $0x348] sm:$0xff]
    %v411 = vld [vmem:[#allocation8 + $0x350] sm:$0xff]
    %v412 = vld [vmem:[#allocation8 + $0x358] sm:$0xff]
    %v413 = vld [vmem:[#allocation8 + $0x360] sm:$0xff]
    %v414 = vld [vmem:[#allocation8 + $0x368] sm:$0xff]
    %v415 = vld [vmem:[#allocation8 + $0x370] sm:$0xff]
    %v416 = vld [vmem:[#allocation8 + $0x378] sm:$0xff]
    %v417 = vld [vmem:[#allocation8 + $0x380] sm:$0xff]
    %v418 = vld [vmem:[#allocation8 + $0x388] sm:$0xff]
    %v419 = vld [vmem:[#allocation8 + $0x390] sm:$0xff]
    %v420 = vld [vmem:[#allocation8 + $0x398] sm:$0xff]
    %v421 = vld [vmem:[#allocation8 + $0x3a0] sm:$0xff]
    %v422 = vld [vmem:[#allocation8 + $0x3a8] sm:$0xff]
    %v423 = vld [vmem:[#allocation8 + $0x3b0] sm:$0xff]
    %v424 = vld [vmem:[#allocation8 + $0x3b8] sm:$0xff]
    %v425 = vld [vmem:[#allocation8 + $0x3c0] sm:$0xff]
    %v426 = vld [vmem:[#allocation8 + $0x3c8] sm:$0xff]
    %v427 = vld [vmem:[#allocation8 + $0x3d0] sm:$0xff]
    %v428 = vld [vmem:[#allocation8 + $0x3d8] sm:$0xff]
    %v429 = vld [vmem:[#allocation8 + $0x3e0] sm:$0xff]
    %v430 = vld [vmem:[#allocation8 + $0x3e8] sm:$0xff]
    %v431 = vld [vmem:[#allocation8 + $0x3f0] sm:$0xff]
    %v432 = vld [vmem:[#allocation8 + $0x3f8] sm:$0xff]
    %v433 = vld [vmem:[%s4] sm:$0x3]
    %v435 = vlaneseq
    %v436 = vshrl.u32 %v435, 7
    %v437 = vsub.s32 0, %v436
    %v438 = vrot.slane %v433, %v437
    %v439 = vlaneseq
    %v440 = vshrl.u32 %v439, 7
    %v441 = vsub.s32 1, %v440
    %v442 = vrot.slane %v433, %v441
    %445 = vmatprep.subr.mxu0 %v336
    %446 = vmatpush1.msra.mxu0 %v335
    %447 = vmatprep.subr.mxu0 %v334
    %448 = vmatpush1.msra.mxu0 %v333
    %449 = vmatprep.subr.mxu0 %v332
    %450 = vmatpush1.msra.mxu0 %v331
    %451 = vmatprep.subr.mxu0 %v330
    %452 = vmatpush1.msra.mxu0 %v329
    %453 = vmatprep.subr.mxu0 %v328
    %454 = vmatpush1.msra.mxu0 %v327
    %455 = vmatprep.subr.mxu0 %v326
    %456 = vmatpush1.msra.mxu0 %v325
    %457 = vmatprep.subr.mxu0 %v324
    %458 = vmatpush1.msra.mxu0 %v323
    %459 = vmatprep.subr.mxu0 %v322
    %460 = vmatpush1.msra.mxu0 %v321
    %461 = vmatprep.subr.mxu0 %v320
    %462 = vmatpush1.msra.mxu0 %v319
    %463 = vmatprep.subr.mxu0 %v318
    %464 = vmatpush1.msra.mxu0 %v317
    %465 = vmatprep.subr.mxu0 %v316
    %466 = vmatpush1.msra.mxu0 %v315
    %467 = vmatprep.subr.mxu0 %v314
    %468 = vmatpush1.msra.mxu0 %v313
    %469 = vmatprep.subr.mxu0 %v312
    %470 = vmatpush1.msra.mxu0 %v311
    %471 = vmatprep.subr.mxu0 %v310
    %472 = vmatpush1.msra.mxu0 %v309
    %473 = vmatprep.subr.mxu0 %v308
    %474 = vmatpush1.msra.mxu0 %v307
    %475 = vmatprep.subr.mxu0 %v306
    %476 = vmatpush1.msra.mxu0 %v305
    %477 = vmatprep.subr.mxu0 %v368
    %478 = vmatpush2.msra.mxu0 %v367
    %479 = vmatprep.subr.mxu0 %v366
    %480 = vmatpush2.msra.mxu0 %v365
    %481 = vmatprep.subr.mxu0 %v364
    %482 = vmatpush2.msra.mxu0 %v363
    %483 = vmatprep.subr.mxu0 %v362
    %484 = vmatpush2.msra.mxu0 %v361
    %485 = vmatprep.subr.mxu0 %v360
    %486 = vmatpush2.msra.mxu0 %v359
    %487 = vmatprep.subr.mxu0 %v358
    %488 = vmatpush2.msra.mxu0 %v357
    %489 = vmatprep.subr.mxu0 %v356
    %490 = vmatpush2.msra.mxu0 %v355
    %491 = vmatprep.subr.mxu0 %v354
    %492 = vmatpush2.msra.mxu0 %v353
    %493 = vmatprep.subr.mxu0 %v352
    %494 = vmatpush2.msra.mxu0 %v351
    %495 = vmatprep.subr.mxu0 %v350
    %496 = vmatpush2.msra.mxu0 %v349
    %497 = vmatprep.subr.mxu0 %v348
    %498 = vmatpush2.msra.mxu0 %v347
    %499 = vmatprep.subr.mxu0 %v346
    %500 = vmatpush2.msra.mxu0 %v345
    %501 = vmatprep.subr.mxu0 %v344
    %502 = vmatpush2.msra.mxu0 %v343
    %503 = vmatprep.subr.mxu0 %v342
    %504 = vmatpush2.msra.mxu0 %v341
    %505 = vmatprep.subr.mxu0 %v340
    %506 = vmatpush2.msra.mxu0 %v339
    %507 = vmatprep.subr.mxu0 %v338
    %508 = vmatpush2.msra.mxu0 %v337
    %509 = vmatprep.mubr.f32.mxu0 %v302
    %510 = vmatmul.mubr.f32.gmra.mxu0 %v301
    %v511 = vpop.f32.mrf.mxu0
    %v512 = vadd.f32 %v438, %v511
    %v513 = vpop.f32.mrf.mxu0
    %v514 = vadd.f32 %v442, %v513
    %515 = vdwg.mxu0
    %516 = vmatprep.subr.mxu0 %v400
    %517 = vmatpush1.msra.mxu0 %v399
    %518 = vmatprep.subr.mxu0 %v398
    %519 = vmatpush1.msra.mxu0 %v397
    %520 = vmatprep.subr.mxu0 %v396
    %521 = vmatpush1.msra.mxu0 %v395
    %522 = vmatprep.subr.mxu0 %v394
    %523 = vmatpush1.msra.mxu0 %v393
    %524 = vmatprep.subr.mxu0 %v392
    %525 = vmatpush1.msra.mxu0 %v391
    %526 = vmatprep.subr.mxu0 %v390
    %527 = vmatpush1.msra.mxu0 %v389
    %528 = vmatprep.subr.mxu0 %v388
    %529 = vmatpush1.msra.mxu0 %v387
    %530 = vmatprep.subr.mxu0 %v386
    %531 = vmatpush1.msra.mxu0 %v385
    %532 = vmatprep.subr.mxu0 %v384
    %533 = vmatpush1.msra.mxu0 %v383
    %534 = vmatprep.subr.mxu0 %v382
    %535 = vmatpush1.msra.mxu0 %v381
    %536 = vmatprep.subr.mxu0 %v380
    %537 = vmatpush1.msra.mxu0 %v379
    %538 = vmatprep.subr.mxu0 %v378
    %539 = vmatpush1.msra.mxu0 %v377
    %540 = vmatprep.subr.mxu0 %v376
    %541 = vmatpush1.msra.mxu0 %v375
    %542 = vmatprep.subr.mxu0 %v374
    %543 = vmatpush1.msra.mxu0 %v373
    %544 = vmatprep.subr.mxu0 %v372
    %545 = vmatpush1.msra.mxu0 %v371
    %546 = vmatprep.subr.mxu0 %v370
    %547 = vmatpush1.msra.mxu0 %v369
    %548 = vmatprep.subr.mxu0 %v432
    %549 = vmatpush2.msra.mxu0 %v431
    %550 = vmatprep.subr.mxu0 %v430
    %551 = vmatpush2.msra.mxu0 %v429
    %552 = vmatprep.subr.mxu0 %v428
    %553 = vmatpush2.msra.mxu0 %v427
    %554 = vmatprep.subr.mxu0 %v426
    %555 = vmatpush2.msra.mxu0 %v425
    %556 = vmatprep.subr.mxu0 %v424
    %557 = vmatpush2.msra.mxu0 %v423
    %558 = vmatprep.subr.mxu0 %v422
    %559 = vmatpush2.msra.mxu0 %v421
    %560 = vmatprep.subr.mxu0 %v420
    %561 = vmatpush2.msra.mxu0 %v419
    %562 = vmatprep.subr.mxu0 %v418
    %563 = vmatpush2.msra.mxu0 %v417
    %564 = vmatprep.subr.mxu0 %v416
    %565 = vmatpush2.msra.mxu0 %v415
    %566 = vmatprep.subr.mxu0 %v414
    %567 = vmatpush2.msra.mxu0 %v413
    %568 = vmatprep.subr.mxu0 %v412
    %569 = vmatpush2.msra.mxu0 %v411
    %570 = vmatprep.subr.mxu0 %v410
    %571 = vmatpush2.msra.mxu0 %v409
    %572 = vmatprep.subr.mxu0 %v408
    %573 = vmatpush2.msra.mxu0 %v407
    %574 = vmatprep.subr.mxu0 %v406
    %575 = vmatpush2.msra.mxu0 %v405
    %576 = vmatprep.subr.mxu0 %v404
    %577 = vmatpush2.msra.mxu0 %v403
    %578 = vmatprep.subr.mxu0 %v402
    %579 = vmatpush2.msra.mxu0 %v401
    %580 = vmatprep.mubr.f32.mxu0 %v304
    %581 = vmatmul.mubr.f32.gmra.mxu0 %v303
    %v582 = vpop.f32.mrf.mxu0
    %v583 = vadd.f32 %v512, %v582
    %v584 = vpop.f32.mrf.mxu0
    %v585 = vadd.f32 %v514, %v584
    %586 = vdwg.mxu0
    %v587 = vmax.f32 %v583, 0.0
    %v588 = vmax.f32 %v585, 0.0
    %v591 = vcombine.low %v587, %v588
    %v593 = vunpack.c.l.s4 1983009808
    %v594 = vunpack.c.0.s8 %v593
    %v595 = vlaneseq
    %v596 = vshrl.u32 %v595, 7
    %v597 = vsub.s32 %v594, %v596
    %v598 = vrot.slane %v591, %v597
    %600 = vst [vmem:[#allocation10] sm:$0xf] %v598
    // Predicated region
    $region38: #{tpu_custom_call.1} parent=1 // pred_check
      _
    $region39: #{tpu_custom_call.1} parent=1 // pred_check_branch
      %602 = sbr.rel (0) target = $region41
    $region40: #{tpu_custom_call.1} parent=1 // pred_region
      %s604 = ssub.s32 64, 64
      %605 = vsyncadd [#allocation4], %s604
      %s607 = sshll.u32 [#allocation10], 4
      %s608 = int_to_ptr.vmem [resolvable:$true] %s607
      %610 = dma.vmem_to_hbm [thread:$0]  %s608, 64, %s5, [#allocation4]
    $region41: #{tpu_custom_call.1} parent=1 // pred_fallthru
      _
    // Predicated region
    $region42: #{tpu_custom_call.1} parent=1 // pred_check
      _
    $region43: #{tpu_custom_call.1} parent=1 // pred_check_branch
      %612 = sbr.rel (0) target = $region45
    $region44: #{tpu_custom_call.1} parent=1 // pred_region
      %613 = dma.done [#allocation4], 64
    $region45: #{tpu_custom_call.1} parent=1 // pred_fallthru
      _
    %614 = vsyncpa [#allocation3], 1
    %615 = vsyncpa [#allocation6], 1
    %616 = vsyncpa [#allocation9], 1
    %617 = vsyncpa [#allocation4], 1

</llo_original>
